<compile_context>
chip_gen: v7x
topology: tpu7x:2x2x1
jax: 0.10.0
libtpu: 0.0.40
codegen_flags: <defaults>
</compile_context>

<pallas_src>
import functools

import jax
import jax.numpy as jnp
from jax.experimental import pallas as pl
from jax.experimental.pallas import tpu as pltpu

LANES = 128
CHUNK_ROWS = 256                 # 256*128*4B = 128 KiB f32 per in-kernel chunk
MAX_BLOCK_ROWS = 8192            # 8192*128*4B = 4 MiB f32 per input tile
VMEM_LIMIT_BYTES = 32 * 1024 * 1024


def _round_up(v, m):
    return ((v + m - 1) // m) * m


def _cdiv(a, b):
    return (a + b - 1) // b


def _charbonnier_kernel(x_ref, y_ref, o_ref, acc_ref, *, eps, n, block_rows,
                        bpc, chunk_rows, need_mask):
    c = pl.program_id(0)      # split index ("parallel": one per TensorCore)
    i = pl.program_id(1)      # reduction step within the split ("arbitrary")

    @pl.when(i == 0)
    def _():
        acc_ref[...] = jnp.zeros_like(acc_ref)

    # Intended (unclamped) first global row of this step; used for masking so
    # clamped/duplicated DMA steps and garbage rows of ragged blocks add zero.
    row0 = (c * bpc + i) * block_rows

    full_rows = n // LANES    # rows that are entirely valid
    rem = n % LANES           # valid lanes in the final partial row (0 => none)
    nchunks = block_rows // chunk_rows

    def body(j, carry):
        r = pl.multiple_of(j * chunk_rows, 8)
        xc = x_ref[pl.ds(r, chunk_rows), :].astype(jnp.float32)
        yc = y_ref[pl.ds(r, chunk_rows), :].astype(jnp.float32)
        d = xc - yc
        v = jnp.sqrt(d * d + jnp.float32(eps))
        if need_mask:
            grow = row0 + r + jax.lax.broadcasted_iota(
                jnp.int32, (chunk_rows, LANES), 0)
            mask = grow < full_rows
            if rem:
                lane = jax.lax.broadcasted_iota(
                    jnp.int32, (chunk_rows, LANES), 1)
                mask = mask | ((grow == full_rows) & (lane < rem))
            v = jnp.where(mask, v, jnp.float32(0.0))
        # Fold the chunk into one vreg-sized (8, 128) partial: pure VPU adds.
        acc_ref[...] += v.reshape(-1, 8, LANES).sum(axis=0)
        return carry

    jax.lax.fori_loop(0, nchunks, body, 0)

    @pl.when(i == pl.num_programs(1) - 1)
    def _():
        o_ref[...] = acc_ref[...]   # full, unmasked lane-dense (8,128) store


def charbonnier_loss(x, y, eps=1e-6):
    """Pallas TPU implementation of CharbonnierLoss.forward (scalar sum)."""
    assert x.shape == y.shape and x.dtype == y.dtype
    n = int(x.size)
    itemsize = x.dtype.itemsize
    sub = {2: 16, 1: 32}.get(itemsize, 8)   # dtype-dependent sublane tile

    xf = x.reshape(-1)
    yf = y.reshape(-1)

    rows = _cdiv(n, LANES)
    lane_pad = rows * LANES - n
    if lane_pad:
        # Only ragged element counts need this copy (reshape to (rows, 128));
        # the padded tail is masked out inside the kernel.
        xf = jnp.pad(xf, (0, lane_pad))
        yf = jnp.pad(yf, (0, lane_pad))
    xs = xf.reshape(rows, LANES)
    ys = yf.reshape(rows, LANES)

    # Tile geometry: big blocks, chunked internally.
    rows_aligned = _round_up(rows, sub)
    if rows_aligned <= CHUNK_ROWS:
        block_rows = rows_aligned
        chunk_rows = block_rows
    else:
        block_rows = min(_round_up(rows, CHUNK_ROWS), MAX_BLOCK_ROWS)
        chunk_rows = CHUNK_ROWS
        row_blocks = _cdiv(rows, block_rows)
        if row_blocks > 1 and row_blocks % 2:
            # Prefer an even block count so both v7x TensorCores get equal
            # work and no duplicate (clamped) HBM reads are needed.
            block_rows = min(
                _round_up(_cdiv(rows, row_blocks + 1), CHUNK_ROWS),
                MAX_BLOCK_ROWS)
    row_blocks = _cdiv(rows, block_rows)
    num_splits = 2 if (row_blocks >= 2 and row_blocks % 2 == 0) else 1
    bpc = _cdiv(row_blocks, num_splits)     # reduction steps per split
    last_blk = row_blocks - 1
    coverage = num_splits * bpc * block_rows * LANES
    need_mask = coverage > n                # ragged rows / lane tail present

    def in_map(c, i):
        # Clamp so DMAs never start past the end of the slab; the kernel masks
        # by the *unclamped* index, so clamped steps contribute exactly zero.
        return (jnp.minimum(c * bpc + i, last_blk), 0)

    kernel = functools.partial(
        _charbonnier_kernel, eps=float(eps), n=n, block_rows=block_rows,
        bpc=bpc, chunk_rows=chunk_rows, need_mask=need_mask)

    out = pl.pallas_call(
        kernel,
        out_shape=jax.ShapeDtypeStruct((num_splits * 8, LANES), jnp.float32),
        grid_spec=pltpu.PrefetchScalarGridSpec(
            num_scalar_prefetch=0,
            grid=(num_splits, bpc),
            in_specs=[
                pl.BlockSpec((block_rows, LANES), in_map),
                pl.BlockSpec((block_rows, LANES), in_map),
            ],
            out_specs=pl.BlockSpec((8, LANES), lambda c, i: (c, 0)),
            scratch_shapes=[pltpu.VMEM((8, LANES), jnp.float32)],
        ),
        compiler_params=pltpu.CompilerParams(
            dimension_semantics=("parallel", "arbitrary"),
            vmem_limit_bytes=VMEM_LIMIT_BYTES,
        ),
        cost_estimate=pl.CostEstimate(
            flops=5 * n,
            transcendentals=n,
            bytes_accessed=2 * n * itemsize + num_splits * 8 * LANES * 4,
        ),
    )(xs, ys)

    # Tiny final reduce of the per-core (8, 128) partial sums.
    return jnp.sum(out)


if __name__ == "__main__":
    key = jax.random.PRNGKey(0)
    kx, ky = jax.random.split(key)

    # NCHW inputs, as the PyTorch module would receive.
    shape = (2, 4, 16, 16)
    x = jax.random.normal(kx, shape, dtype=jnp.float32)
    y = jax.random.normal(ky, shape, dtype=jnp.float32)

    loss = jax.block_until_ready(charbonnier_loss(x, y, eps=1e-6))

    ref = jnp.sum(jnp.sqrt((x - y) * (x - y) + 1e-6))
    assert jnp.allclose(loss, ref, rtol=1e-5, atol=1e-3), (loss, ref)

    # Extra checks: a ragged element count (exercises the in-kernel mask path)
    # and a large shape spanning two row-blocks (exercises the 2-way split).
    for extra_shape in [(3, 5, 7, 11), (4, 8, 256, 256)]:
        ka, kb = jax.random.split(jax.random.PRNGKey(1 + extra_shape[0]))
        xa = jax.random.normal(ka, extra_shape, dtype=jnp.float32)
        yb = jax.random.normal(kb, extra_shape, dtype=jnp.float32)
        got = jax.block_until_ready(charbonnier_loss(xa, yb, eps=1e-6))
        want = jnp.sum(jnp.sqrt((xa - yb) * (xa - yb) + 1e-6))
        assert jnp.allclose(got, want, rtol=1e-5, atol=1e-2), (extra_shape, got, want)

    print("KERNEL_OK")
</pallas_src>

<mosaic_0001>
module attributes {stable_mosaic.version = 11 : i64} {
  func.func @_charbonnier_kernel(%arg0: i32, %arg1: i32, %arg2: memref<16x128xf32, #tpu.memory_space<vmem>>, %arg3: memref<16x128xf32, #tpu.memory_space<vmem>>, %arg4: memref<8x128xf32, #tpu.memory_space<vmem>>, %arg5: memref<8x128xf32, #tpu.memory_space<vmem>>) attributes {dimension_semantics = [#tpu.dimension_semantics<parallel>, #tpu.dimension_semantics<arbitrary>], iteration_bounds = array<i64: 1, 1>, scalar_prefetch = 0 : i64, scratch_operands = 1 : i64, tpu.core_type = #tpu.core_type<tc>, window_params = [{transform_indices = @transform_0, window_bounds = array<i64: 16, 128>}, {transform_indices = @transform_1, window_bounds = array<i64: 16, 128>}, {transform_indices = @transform_2, window_bounds = array<i64: 8, 128>}]} {
    %c0_i32 = arith.constant 0 : i32
    %0 = arith.cmpi eq, %arg1, %c0_i32 : i32
    %1 = arith.extui %0 : i1 to i32
    %c0_i32_0 = arith.constant 0 : i32
    %2 = arith.cmpi ne, %1, %c0_i32_0 : i32
    scf.if %2 {
      %cst_10 = arith.constant 0.000000e+00 : f32
      %22 = vector.broadcast %cst_10 : f32 to vector<8x128xf32>
      %c0_11 = arith.constant 0 : index
      %c0_12 = arith.constant 0 : index
      %23 = vector.load %arg5[%c0_11, %c0_12] : memref<8x128xf32, #tpu.memory_space<vmem>>, vector<8x128xf32>
      tpu.vector_store %arg5[%c0_11, %c0_12], %22 {strides = array<i32>} : memref<8x128xf32, #tpu.memory_space<vmem>>, vector<8x128xf32>,
    } else {
    }
    %c0_i32_1 = arith.constant 0 : i32
    %c16_i32 = arith.constant 16 : i32
    %3 = arith.muli %c0_i32_1, %c16_i32 : i32
    %4 = tpu.assume_multiple %3, 8 : i32
    %5 = arith.index_cast %4 : i32 to index
    %c0 = arith.constant 0 : index
    %6 = vector.load %arg2[%5, %c0] : memref<16x128xf32, #tpu.memory_space<vmem>>, vector<16x128xf32>
    %7 = arith.index_cast %4 : i32 to index
    %c0_2 = arith.constant 0 : index
    %8 = vector.load %arg3[%7, %c0_2] : memref<16x128xf32, #tpu.memory_space<vmem>>, vector<16x128xf32>
    %9 = arith.subf %6, %8 : vector<16x128xf32>
    %10 = arith.mulf %9, %9 : vector<16x128xf32>
    %cst = arith.constant 9.99999997E-7 : f32
    %11 = vector.broadcast %cst : f32 to vector<16x128xf32>
    %12 = arith.addf %10, %11 : vector<16x128xf32>
    %13 = math.sqrt %12 : vector<16x128xf32>
    %c0_3 = arith.constant 0 : index
    %c0_4 = arith.constant 0 : index
    %14 = vector.load %arg5[%c0_3, %c0_4] : memref<8x128xf32, #tpu.memory_space<vmem>>, vector<8x128xf32>
    %15 = vector.shape_cast %13 : vector<16x128xf32> to vector<2x8x128xf32>
    %cst_5 = arith.constant dense<0.000000e+00> : vector<8x128xf32>
    %16 = vector.multi_reduction <add>, %15, %cst_5 [0] : vector<2x8x128xf32> to vector<8x128xf32>
    %17 = arith.addf %14, %16 : vector<8x128xf32>
    %c0_6 = arith.constant 0 : index
    %c0_7 = arith.constant 0 : index
    %18 = vector.load %arg5[%c0_6, %c0_7] : memref<8x128xf32, #tpu.memory_space<vmem>>, vector<8x128xf32>
    tpu.vector_store %arg5[%c0_6, %c0_7], %17 {strides = array<i32>} : memref<8x128xf32, #tpu.memory_space<vmem>>, vector<8x128xf32>,
    %c1_i32 = arith.constant 1 : i32
    %c0_i32_8 = arith.constant 0 : i32
    %19 = arith.cmpi eq, %arg1, %c0_i32_8 : i32
    %20 = arith.extui %19 : i1 to i32
    %c0_i32_9 = arith.constant 0 : i32
    %21 = arith.cmpi ne, %20, %c0_i32_9 : i32
    scf.if %21 {
      %c0_10 = arith.constant 0 : index
      %c0_11 = arith.constant 0 : index
      %22 = vector.load %arg5[%c0_10, %c0_11] : memref<8x128xf32, #tpu.memory_space<vmem>>, vector<8x128xf32>
      %c0_12 = arith.constant 0 : index
      %c0_13 = arith.constant 0 : index
      %23 = vector.load %arg4[%c0_12, %c0_13] : memref<8x128xf32, #tpu.memory_space<vmem>>, vector<8x128xf32>
      tpu.vector_store %arg4[%c0_12, %c0_13], %22 {strides = array<i32>} : memref<8x128xf32, #tpu.memory_space<vmem>>, vector<8x128xf32>,
    } else {
    }
    return
  }
  func.func @transform_0(%arg0: i32, %arg1: i32) -> (i32, i32) {
    %c1_i32 = arith.constant 1 : i32
    %0 = arith.muli %arg0, %c1_i32 : i32
    %1 = arith.addi %0, %arg1 : i32
    %c0_i32 = arith.constant 0 : i32
    %2 = arith.minsi %1, %c0_i32 : i32
    %c0_i32_0 = arith.constant 0 : i32
    %c0_i32_1 = arith.constant 0 : i32
    return %2, %c0_i32_0 : i32, i32
  }
  func.func @transform_1(%arg0: i32, %arg1: i32) -> (i32, i32) {
    %c1_i32 = arith.constant 1 : i32
    %0 = arith.muli %arg0, %c1_i32 : i32
    %1 = arith.addi %0, %arg1 : i32
    %c0_i32 = arith.constant 0 : i32
    %2 = arith.minsi %1, %c0_i32 : i32
    %c0_i32_0 = arith.constant 0 : i32
    %c0_i32_1 = arith.constant 0 : i32
    return %2, %c0_i32_0 : i32, i32
  }
  func.func @transform_2(%arg0: i32, %arg1: i32) -> (i32, i32) {
    %c0_i32 = arith.constant 0 : i32
    %c0_i32_0 = arith.constant 0 : i32
    return %arg0, %c0_i32 : i32, i32
  }
}

</mosaic_0001>

<llo_original>
// kernel: tpu_custom_call.1
$region0: #{tpu_custom_call.1}
  #allocation0 [shape = 'u32[]', space=smem, size = 0x4, offset = 0x4, fixed_abs, tag = 'smem constant byte address 0x4 - core index']
  #allocation1 [shape = 'u32[144,128]{1,0:T(1,128)}', space=vmem, size = 0x12000, scoped, tag = 'internal scratch']
  #allocation2 [shape = 'f32[8,128]{1,0:T(8,128)}', space=vmem, size = 0x1000, scoped, tag = 'scratch operand']
  %s0 = inlined_call_operand.hbm [shape: f32[16,128], index: 0, kind: input, shape index: {}]
  %s1 = inlined_call_operand.hbm [shape: f32[16,128], index: 1, kind: input, shape index: {}]
  %s2 = inlined_call_operand.hbm [shape: f32[8,128], index: 2, kind: output, shape index: {}]
  %s3 = sld [smem:[#allocation0]]
  $region34: #{tpu_custom_call.1} parent=0
    _
  %s5 = ssub.s32 1, %s3
  %s6 = scalar_select 0, %s5, %s3
  $region1: #{tpu_custom_call.1} parent=0
    #allocation3 [shape = 'u8[8192]{0}', space=vmem, size = 0x2000, scoped, tag = 'input window, operand 0, single buffered']
    #allocation4 [shape = 's32[1]{0}', space=sflag, size = 0x4, scoped, tag = 'scoped memory for tpu_custom_call.1']
    #allocation5 [shape = 's32[1]{0}', space=sflag, size = 0x4, scoped, tag = 'scoped memory for tpu_custom_call.1']
    #allocation6 [shape = 'u8[8192]{0}', space=vmem, size = 0x2000, scoped, tag = 'input window, operand 1, single buffered']
    #allocation7 [shape = 's32[1]{0}', space=sflag, size = 0x4, scoped, tag = 'scoped memory for tpu_custom_call.1']
    #allocation8 [shape = 'u8[4096]{0}', space=vmem, size = 0x1000, scoped, tag = 'output window, operand 0, single buffered']
    %7 = vsyncpa [#allocation4], 0
    %8 = vsyncpa [#allocation7], 0
    %9 = vsyncpa [#allocation5], 0
    // Predicated region
    $region2: #{tpu_custom_call.1} parent=1 // pred_check
      _
    $region3: #{tpu_custom_call.1} parent=1 // pred_check_branch
      %11 = sbr.rel (0) target = $region5
    $region4: #{tpu_custom_call.1} parent=1 // pred_region
      %s12 = sadd.s32 0, 0
      %p13 = scmp.lt.s32.totalorder %s12, 0
      %s14 = scalar_select %p13, %s12, 0
      %s15 = smul.u32 2, %s14
      %s17 = ssub.s32 256, 256
      %18 = vsyncadd [#allocation4], %s17
      %s19 = smul.addr %s15, 128
      %s20 = scalar_lea.hbm %s0, %s19
      %s21 = sshll.u32 [#allocation3], 4
      %s22 = int_to_ptr.vmem [resolvable:$true] %s21
      %27 = dma.hbm_to_vmem [thread:$0]  %s20, 256, %s22, [#allocation4], 128, 128, 8
    $region5: #{tpu_custom_call.1} parent=1 // pred_fallthru
      _
    // Predicated region
    $region6: #{tpu_custom_call.1} parent=1 // pred_check
      _
    $region7: #{tpu_custom_call.1} parent=1 // pred_check_branch
      %29 = sbr.rel (0) target = $region9
    $region8: #{tpu_custom_call.1} parent=1 // pred_region
      %s30 = sadd.s32 0, 0
      %p31 = scmp.lt.s32.totalorder %s30, 0
      %s32 = scalar_select %p31, %s30, 0
      %s33 = smul.u32 2, %s32
      %s35 = ssub.s32 256, 256
      %36 = vsyncadd [#allocation7], %s35
      %s37 = smul.addr %s33, 128
      %s38 = scalar_lea.hbm %s1, %s37
      %s39 = sshll.u32 [#allocation6], 4
      %s40 = int_to_ptr.vmem [resolvable:$true] %s39
      %45 = dma.hbm_to_vmem [thread:$0]  %s38, 256, %s40, [#allocation7], 128, 128, 8
    $region9: #{tpu_custom_call.1} parent=1 // pred_fallthru
      _
    // Predicated region
    $region10: #{tpu_custom_call.1} parent=1 // pred_check
      _
    $region11: #{tpu_custom_call.1} parent=1 // pred_check_branch
      %47 = sbr.rel (0) target = $region13
    $region12: #{tpu_custom_call.1} parent=1 // pred_region
      %48 = dma.done [#allocation4], 256
    $region13: #{tpu_custom_call.1} parent=1 // pred_fallthru
      _
    // Predicated region
    $region14: #{tpu_custom_call.1} parent=1 // pred_check
      _
    $region15: #{tpu_custom_call.1} parent=1 // pred_check_branch
      %50 = sbr.rel (0) target = $region17
    $region16: #{tpu_custom_call.1} parent=1 // pred_region
      %51 = dma.done [#allocation7], 256
    $region17: #{tpu_custom_call.1} parent=1 // pred_fallthru
      _
    %s52 = sadd.s32 0, 0
    %p53 = scmp.lt.s32.totalorder %s52, 0
    %s54 = scalar_select %p53, %s52, 0
    %s55 = smul.u32 2, %s54
    %s56 = sadd.s32 0, 0
    %p57 = scmp.lt.s32.totalorder %s56, 0
    %s58 = scalar_select %p57, %s56, 0
    %s59 = smul.u32 2, %s58
    %p60 = scmp.eq.s32.totalorder 0, 0
    // Predicated region
    $region18: #{tpu_custom_call.1} parent=1 // pred_check
      %p61 = pneg %p60
    $region19: #{tpu_custom_call.1} parent=1 // pred_check_branch
      %63 = sbr.rel (%p61) target = $region21
    $region20: #{tpu_custom_call.1} parent=1 // pred_region
      %64 = vst [vmem:[#allocation2] sm:$0xff] 0.0
    $region21: #{tpu_custom_call.1} parent=1 // pred_fallthru
      _
    %v65 = vld [vmem:[#allocation3] sm:$0xff]
    %v66 = vld [vmem:[#allocation3 + $0x8] sm:$0xff]
    %v67 = vld [vmem:[#allocation6] sm:$0xff]
    %v68 = vld [vmem:[#allocation6 + $0x8] sm:$0xff]
    %v69 = vsub.f32 %v65, %v67
    %v70 = vsub.f32 %v66, %v68
    %v71 = vmul.f32 %v69, %v69
    %v72 = vmul.f32 %v70, %v70
    %v73 = vadd.f32 %v71, 1e-06
    %v74 = vadd.f32 %v72, 1e-06
    %v75 = vrsqrt.pop %v73
    %v76 = vmul.f32 %v73, %v75
    %vm77 = vcmp.eq.f32.partialorder %v73, inf
    %v78 = vsel %vm77, %v73, %v76
    %vm79 = vcmp.eq.f32.partialorder %v73, 0.0
    %v80 = vand.u32 %v73, 2147483648
    %v81 = vsel %vm79, %v80, %v78
    %v82 = vrsqrt.pop %v74
    %v83 = vmul.f32 %v74, %v82
    %vm84 = vcmp.eq.f32.partialorder %v74, inf
    %v85 = vsel %vm84, %v74, %v83
    %vm86 = vcmp.eq.f32.partialorder %v74, 0.0
    %v87 = vand.u32 %v74, 2147483648
    %v88 = vsel %vm86, %v87, %v85
    %v89 = vld [vmem:[#allocation2] sm:$0xff]
    %v90 = vadd.f32 %v81, %v88
    %v91 = vadd.f32 %v89, %v90
    %92 = vst [vmem:[#allocation2] sm:$0xff] %v91
    // Predicated region
    $region22: #{tpu_custom_call.1} parent=1 // pred_check
      %p93 = pneg %p60
    $region23: #{tpu_custom_call.1} parent=1 // pred_check_branch
      %95 = sbr.rel (%p93) target = $region25
    $region24: #{tpu_custom_call.1} parent=1 // pred_region
      %v96 = vld [vmem:[#allocation2] sm:$0xff]
      %97 = vst [vmem:[#allocation8] sm:$0xff] %v96
    $region25: #{tpu_custom_call.1} parent=1 // pred_fallthru
      _
    // Predicated region
    $region26: #{tpu_custom_call.1} parent=1 // pred_check
      _
    $region27: #{tpu_custom_call.1} parent=1 // pred_check_branch
      %99 = sbr.rel (0) target = $region29
    $region28: #{tpu_custom_call.1} parent=1 // pred_region
      %s101 = ssub.s32 128, 128
      %102 = vsyncadd [#allocation5], %s101
      %s104 = sshll.u32 [#allocation8], 4
      %s105 = int_to_ptr.vmem [resolvable:$true] %s104
      %107 = dma.vmem_to_hbm [thread:$0]  %s105, 128, %s2, [#allocation5]
    $region29: #{tpu_custom_call.1} parent=1 // pred_fallthru
      _
    // Predicated region
    $region30: #{tpu_custom_call.1} parent=1 // pred_check
      _
    $region31: #{tpu_custom_call.1} parent=1 // pred_check_branch
      %109 = sbr.rel (0) target = $region33
    $region32: #{tpu_custom_call.1} parent=1 // pred_region
      %110 = dma.done [#allocation5], 128
    $region33: #{tpu_custom_call.1} parent=1 // pred_fallthru
      _
    %111 = vsyncpa [#allocation4], 1
    %112 = vsyncpa [#allocation7], 1
    %113 = vsyncpa [#allocation5], 1

</llo_original>
